<compile_context>
chip_gen: v5e
topology: v5e:2x2
jax: 0.10.0
libtpu: 0.0.40
codegen_flags: <defaults>
</compile_context>

<pallas_src>
import functools

import jax
import jax.numpy as jnp
from jax.experimental import pallas as pl
from jax.experimental.pallas import tpu as pltpu

IN_DIM = 784
HID = 100
HID_PAD = 128
OUT_DIM = 10


def binarynet_kernel(x_ref, w1_ref, b1_ref, w2_ref, b2_ref, o_ref, *, slope):
    # x_ref: (TB, 784) bf16, w1_ref: (784, 128) bf16, b1_ref: (1, 128) f32
    # w2_ref: (128, 10) bf16, b2_ref: (1, 10) f32, o_ref: (TB, 10) f32

    # fc1 on the MXU with f32 accumulation.
    h = jnp.dot(x_ref[...], w1_ref[...],
                preferred_element_type=jnp.float32) + b1_ref[...]        # (TB, 128) f32

    # DeterministicBinaryActivation (ST forward):
    #   (clip(slope*h, -1, 1) + 1) * 0.5 >= 0.5  <=>  slope*h >= 0
    # Padded hidden lanes give binary=1, but their w2 rows are zero -> no effect.
    binary = (slope * h >= 0.0).astype(jnp.bfloat16)                     # (TB, 128) {0,1}

    # fc2 on the MXU with f32 accumulation.
    logits = jnp.dot(binary, w2_ref[...],
                     preferred_element_type=jnp.float32) + b2_ref[...]   # (TB, 10) f32

    # Numerically stable log_softmax over dim=1 (exp -> EUP, reductions -> XLU).
    m = jnp.max(logits, axis=1, keepdims=True)
    shifted = logits - m
    lse = jnp.log(jnp.sum(jnp.exp(shifted), axis=1, keepdims=True))
    o_ref[...] = shifted - lse


def binarynet_forward(x_nchw, slope, params):
    """params = (w1, b1, w2, b2) with w1:(784,100), b1:(1,100), w2:(100,10), b2:(1,10)."""
    w1, b1, w2, b2 = params

    B = x_nchw.shape[0]
    x2d = x_nchw.reshape(B, IN_DIM)                      # == torch .view(-1, 784)

    # Batch tile: ~512 rows hits the measured HBM-roofline sweet spot; for tiny
    # batches just round up to the sublane multiple (8).
    if B >= 512:
        TB = 512
    else:
        TB = max(8, ((B + 7) // 8) * 8)
    B_pad = pl.cdiv(B, TB) * TB

    # Pad batch with zero rows (sliced off below) and cast to bf16.
    x_p = jnp.zeros((B_pad, IN_DIM), jnp.bfloat16).at[:B].set(x2d.astype(jnp.bfloat16))

    # Zero-pad hidden dim 100 -> 128 once, outside the kernel.
    w1_p = jnp.zeros((IN_DIM, HID_PAD), jnp.bfloat16).at[:, :HID].set(w1.astype(jnp.bfloat16))
    b1_p = jnp.zeros((1, HID_PAD), jnp.float32).at[:, :HID].set(b1.astype(jnp.float32))
    w2_p = jnp.zeros((HID_PAD, OUT_DIM), jnp.bfloat16).at[:HID, :].set(w2.astype(jnp.bfloat16))
    b2_p = b2.astype(jnp.float32)

    kernel = functools.partial(binarynet_kernel, slope=float(slope))

    out = pl.pallas_call(
        kernel,
        out_shape=jax.ShapeDtypeStruct((B_pad, OUT_DIM), jnp.float32),
        grid=(B_pad // TB,),
        in_specs=[
            pl.BlockSpec((TB, IN_DIM), lambda i: (i, 0)),        # x: pipelined per batch tile
            pl.BlockSpec((IN_DIM, HID_PAD), lambda i: (0, 0)),   # w1: resident
            pl.BlockSpec((1, HID_PAD), lambda i: (0, 0)),        # b1: resident
            pl.BlockSpec((HID_PAD, OUT_DIM), lambda i: (0, 0)),  # w2: resident
            pl.BlockSpec((1, OUT_DIM), lambda i: (0, 0)),        # b2: resident
        ],
        out_specs=pl.BlockSpec((TB, OUT_DIM), lambda i: (i, 0)),
        compiler_params=pltpu.CompilerParams(
            dimension_semantics=("parallel",),
        ),
    )(x_p, w1_p, b1_p, w2_p, b2_p)

    return out[:B]


def init_params(key):
    # Deterministic init matching nn.Linear's default U(-1/sqrt(fan_in), 1/sqrt(fan_in)).
    k1, k2, k3, k4 = jax.random.split(key, 4)
    lim1 = 1.0 / jnp.sqrt(784.0)
    lim2 = 1.0 / jnp.sqrt(100.0)
    w1 = jax.random.uniform(k1, (IN_DIM, HID), jnp.float32, -lim1, lim1)   # (in, out)
    b1 = jax.random.uniform(k2, (1, HID), jnp.float32, -lim1, lim1)
    w2 = jax.random.uniform(k3, (HID, OUT_DIM), jnp.float32, -lim2, lim2)  # (in, out)
    b2 = jax.random.uniform(k4, (1, OUT_DIM), jnp.float32, -lim2, lim2)
    return (w1, b1, w2, b2)


def ref_forward(x_nchw, slope, params):
    # Pure-JAX reference mirroring the kernel's dtypes (bf16 operands, f32 accum).
    w1, b1, w2, b2 = params
    B = x_nchw.shape[0]
    x = x_nchw.reshape(B, IN_DIM).astype(jnp.bfloat16)
    h = jnp.dot(x, w1.astype(jnp.bfloat16), preferred_element_type=jnp.float32) + b1
    binary = (slope * h >= 0.0).astype(jnp.bfloat16)
    logits = jnp.dot(binary, w2.astype(jnp.bfloat16),
                     preferred_element_type=jnp.float32) + b2
    return jax.nn.log_softmax(logits, axis=1)


if __name__ == "__main__":
    key = jax.random.PRNGKey(0)
    kx, kp = jax.random.split(key)

    # MNIST-like input: (batch=2, channels=1, 28, 28); slope scalar = 1.0
    x = jax.random.normal(kx, (2, 1, 28, 28), dtype=jnp.float32)
    slope = 1.0
    params = init_params(kp)

    out = binarynet_forward(x, slope, params)
    jax.block_until_ready(out)

    assert out.shape == (2, 10) and out.dtype == jnp.float32
    # log_softmax rows should (approximately) exp-sum to 1
    row_sums = jnp.sum(jnp.exp(out), axis=1)
    assert bool(jnp.all(jnp.abs(row_sums - 1.0) < 1e-4))
    # Match the pure-JAX reference (same dtype recipe).
    ref = ref_forward(x, slope, params)
    assert bool(jnp.all(jnp.abs(out - ref) < 1e-3))

    print("KERNEL_OK")
</pallas_src>

<mosaic_0001>
module attributes {stable_mosaic.version = 11 : i64} {
  func.func @binarynet_kernel(%arg0: i32, %arg1: memref<8x784xbf16, #tpu.memory_space<vmem>>, %arg2: memref<784x128xbf16, #tpu.memory_space<vmem>>, %arg3: memref<1x128xf32, #tpu.memory_space<vmem>>, %arg4: memref<128x10xbf16, #tpu.memory_space<vmem>>, %arg5: memref<1x10xf32, #tpu.memory_space<vmem>>, %arg6: memref<8x10xf32, #tpu.memory_space<vmem>>) attributes {dimension_semantics = [#tpu.dimension_semantics<parallel>], iteration_bounds = array<i64: 1>, scalar_prefetch = 0 : i64, scratch_operands = 0 : i64, tpu.core_type = #tpu.core_type<tc>, window_params = [{transform_indices = @transform_0, window_bounds = array<i64: 8, 784>}, {pipeline_mode = #tpu.pipeline_mode<synchronous>, transform_indices = @transform_1, window_bounds = array<i64: 784, 128>}, {pipeline_mode = #tpu.pipeline_mode<synchronous>, transform_indices = @transform_2, window_bounds = array<i64: 1, 128>}, {pipeline_mode = #tpu.pipeline_mode<synchronous>, transform_indices = @transform_3, window_bounds = array<i64: 128, 10>}, {pipeline_mode = #tpu.pipeline_mode<synchronous>, transform_indices = @transform_4, window_bounds = array<i64: 1, 10>}, {transform_indices = @transform_5, window_bounds = array<i64: 8, 10>}]} {
    %c0 = arith.constant 0 : index
    %c0_0 = arith.constant 0 : index
    %0 = vector.load %arg1[%c0, %c0_0] : memref<8x784xbf16, #tpu.memory_space<vmem>>, vector<8x784xbf16>
    %c0_1 = arith.constant 0 : index
    %c0_2 = arith.constant 0 : index
    %1 = vector.load %arg2[%c0_1, %c0_2] : memref<784x128xbf16, #tpu.memory_space<vmem>>, vector<784x128xbf16>
    %cst = arith.constant dense<0.000000e+00> : vector<8x128xf32>
    %2 = tpu.matmul %0, %1, %cst {dimension_numbers = #tpu.dot_dimension_numbers<[1], [0], [0], [1], [0, 0, 1, 1], [], []>} : vector<8x784xbf16>, vector<784x128xbf16>, vector<8x128xf32> -> vector<8x128xf32>
    %c0_3 = arith.constant 0 : index
    %c0_4 = arith.constant 0 : index
    %3 = vector.load %arg3[%c0_3, %c0_4] : memref<1x128xf32, #tpu.memory_space<vmem>>, vector<1x128xf32>
    %4 = vector.broadcast %3 : vector<1x128xf32> to vector<8x128xf32>
    %5 = arith.addf %2, %4 : vector<8x128xf32>
    %cst_5 = arith.constant 1.000000e+00 : f32
    %6 = vector.broadcast %cst_5 : f32 to vector<8x128xf32>
    %7 = arith.mulf %6, %5 : vector<8x128xf32>
    %cst_6 = arith.constant 0.000000e+00 : f32
    %8 = vector.broadcast %cst_6 : f32 to vector<8x128xf32>
    %9 = arith.cmpf oge, %7, %8 : vector<8x128xf32>
    %10 = arith.extui %9 : vector<8x128xi1> to vector<8x128xi32>
    %11 = arith.sitofp %10 : vector<8x128xi32> to vector<8x128xf32>
    %12 = arith.truncf %11 : vector<8x128xf32> to vector<8x128xbf16>
    %c0_7 = arith.constant 0 : index
    %c0_8 = arith.constant 0 : index
    %13 = vector.load %arg4[%c0_7, %c0_8] : memref<128x10xbf16, #tpu.memory_space<vmem>>, vector<128x10xbf16>
    %cst_9 = arith.constant dense<0.000000e+00> : vector<8x10xf32>
    %14 = tpu.matmul %12, %13, %cst_9 {dimension_numbers = #tpu.dot_dimension_numbers<[1], [0], [0], [1], [0, 0, 1, 1], [], []>} : vector<8x128xbf16>, vector<128x10xbf16>, vector<8x10xf32> -> vector<8x10xf32>
    %c0_10 = arith.constant 0 : index
    %c0_11 = arith.constant 0 : index
    %15 = vector.load %arg5[%c0_10, %c0_11] : memref<1x10xf32, #tpu.memory_space<vmem>>, vector<1x10xf32>
    %16 = vector.broadcast %15 : vector<1x10xf32> to vector<8x10xf32>
    %17 = arith.addf %14, %16 : vector<8x10xf32>
    %cst_12 = arith.constant dense<0xFF800000> : vector<8xf32>
    %18 = vector.multi_reduction <maximumf>, %17, %cst_12 [1] : vector<8x10xf32> to vector<8xf32>
    %19 = vector.shape_cast %18 : vector<8xf32> to vector<8x1xf32>
    %20 = vector.broadcast %19 : vector<8x1xf32> to vector<8x10xf32>
    %21 = arith.subf %17, %20 : vector<8x10xf32>
    %22 = math.exp %21 : vector<8x10xf32>
    %cst_13 = arith.constant dense<0.000000e+00> : vector<8xf32>
    %23 = vector.multi_reduction <add>, %22, %cst_13 [1] : vector<8x10xf32> to vector<8xf32>
    %24 = vector.shape_cast %23 : vector<8xf32> to vector<8x1xf32>
    %25 = math.log %24 : vector<8x1xf32>
    %26 = vector.broadcast %25 : vector<8x1xf32> to vector<8x10xf32>
    %27 = arith.subf %21, %26 : vector<8x10xf32>
    %c0_14 = arith.constant 0 : index
    %c0_15 = arith.constant 0 : index
    %28 = vector.load %arg6[%c0_14, %c0_15] : memref<8x10xf32, #tpu.memory_space<vmem>>, vector<8x10xf32>
    tpu.vector_store %arg6[%c0_14, %c0_15], %27 {strides = array<i32>} : memref<8x10xf32, #tpu.memory_space<vmem>>, vector<8x10xf32>,
    return
  }
  func.func @transform_0(%arg0: i32) -> (i32, i32) {
    %c0_i32 = arith.constant 0 : i32
    %c0_i32_0 = arith.constant 0 : i32
    return %arg0, %c0_i32 : i32, i32
  }
  func.func @transform_1(%arg0: i32) -> (i32, i32) {
    %c0_i32 = arith.constant 0 : i32
    %c0_i32_0 = arith.constant 0 : i32
    %c0_i32_1 = arith.constant 0 : i32
    return %c0_i32, %c0_i32_0 : i32, i32
  }
  func.func @transform_2(%arg0: i32) -> (i32, i32) {
    %c0_i32 = arith.constant 0 : i32
    %c0_i32_0 = arith.constant 0 : i32
    %c0_i32_1 = arith.constant 0 : i32
    return %c0_i32, %c0_i32_0 : i32, i32
  }
  func.func @transform_3(%arg0: i32) -> (i32, i32) {
    %c0_i32 = arith.constant 0 : i32
    %c0_i32_0 = arith.constant 0 : i32
    %c0_i32_1 = arith.constant 0 : i32
    return %c0_i32, %c0_i32_0 : i32, i32
  }
  func.func @transform_4(%arg0: i32) -> (i32, i32) {
    %c0_i32 = arith.constant 0 : i32
    %c0_i32_0 = arith.constant 0 : i32
    %c0_i32_1 = arith.constant 0 : i32
    return %c0_i32, %c0_i32_0 : i32, i32
  }
  func.func @transform_5(%arg0: i32) -> (i32, i32) {
    %c0_i32 = arith.constant 0 : i32
    %c0_i32_0 = arith.constant 0 : i32
    return %arg0, %c0_i32 : i32, i32
  }
}

</mosaic_0001>

<llo_original>
// kernel: tpu_custom_call.1
$region0: #{tpu_custom_call.1}
  #allocation0 [shape = 'u32[]', space=smem, size = 0x4, offset = 0x4, fixed_abs, tag = 'smem constant byte address 0x4 - core index']
  #allocation1 [shape = 'u32[72,128]{1,0:T(1,128)}', space=vmem, size = 0x9000, scoped, tag = 'internal scratch']
  %s0 = inlined_call_operand.vmem [shape: bf16[8,784], index: 0, kind: input, shape index: {}]
  %s1 = inlined_call_operand.hbm [shape: bf16[784,128], index: 1, kind: input, shape index: {}]
  %s2 = inlined_call_operand.vmem [shape: f32[1,128], index: 2, kind: input, shape index: {}]
  %s3 = inlined_call_operand.vmem [shape: bf16[128,10], index: 3, kind: input, shape index: {}]
  %s4 = inlined_call_operand.vmem [shape: f32[1,10], index: 4, kind: input, shape index: {}]
  %s5 = inlined_call_operand.hbm [shape: f32[8,10], index: 5, kind: output, shape index: {}]
  %s6 = sld [smem:[#allocation0]]
  $region34: #{tpu_custom_call.1} parent=0
    _
  %s8 = ssub.s32 1, %s6
  %s9 = scalar_select 0, %s8, %s6
  $region1: #{tpu_custom_call.1} parent=0
    #allocation2 [shape = 'u8[200704]{0}', space=vmem, size = 0x31000, scoped, tag = 'input window, operand 1, single buffered']
    #allocation3 [shape = 's32[1]{0}', space=sflag, size = 0x4, scoped, tag = 'scoped memory for tpu_custom_call.1']
    #allocation4 [shape = 's32[1]{0}', space=sflag, size = 0x4, scoped, tag = 'scoped memory for tpu_custom_call.1']
    #allocation5 [shape = 'u8[4096]{0}', space=vmem, size = 0x1000, scoped, tag = 'output window, operand 0, single buffered']
    %10 = vsyncpa [#allocation3], 0
    %11 = vsyncpa [#allocation4], 0
    // Predicated region
    $region2: #{tpu_custom_call.1} parent=1 // pred_check
      _
    $region3: #{tpu_custom_call.1} parent=1 // pred_check_branch
      %13 = sbr.rel (0) target = $region5
    $region4: #{tpu_custom_call.1} parent=1 // pred_region
      _
    $region5: #{tpu_custom_call.1} parent=1 // pred_fallthru
      _
    // Predicated region
    $region6: #{tpu_custom_call.1} parent=1 // pred_check
      _
    $region7: #{tpu_custom_call.1} parent=1 // pred_check_branch
      %15 = sbr.rel (0) target = $region9
    $region8: #{tpu_custom_call.1} parent=1 // pred_region
      %17 = vsyncadd [#allocation3], 0
      %s18 = sshll.u32 %s1, 4
      %s19 = int_to_ptr.hbm [resolvable:$true] %s18
      %s20 = sshll.u32 [#allocation2], 4
      %s21 = int_to_ptr.vmem [resolvable:$true] %s20
      %26 = dma.hbm_to_vmem [thread:$0]  %s19, 6272, %s21, [#allocation3], 64, 64, 4
    $region9: #{tpu_custom_call.1} parent=1 // pred_fallthru
      _
    // Predicated region
    $region10: #{tpu_custom_call.1} parent=1 // pred_check
      _
    $region11: #{tpu_custom_call.1} parent=1 // pred_check_branch
      %28 = sbr.rel (0) target = $region13
    $region12: #{tpu_custom_call.1} parent=1 // pred_region
      _
    $region13: #{tpu_custom_call.1} parent=1 // pred_fallthru
      _
    // Predicated region
    $region14: #{tpu_custom_call.1} parent=1 // pred_check
      _
    $region15: #{tpu_custom_call.1} parent=1 // pred_check_branch
      %30 = sbr.rel (0) target = $region17
    $region16: #{tpu_custom_call.1} parent=1 // pred_region
      _
    $region17: #{tpu_custom_call.1} parent=1 // pred_fallthru
      _
    // Predicated region
    $region18: #{tpu_custom_call.1} parent=1 // pred_check
      _
    $region19: #{tpu_custom_call.1} parent=1 // pred_check_branch
      %32 = sbr.rel (0) target = $region21
    $region20: #{tpu_custom_call.1} parent=1 // pred_region
      _
    $region21: #{tpu_custom_call.1} parent=1 // pred_fallthru
      _
    // Predicated region
    $region22: #{tpu_custom_call.1} parent=1 // pred_check
      _
    $region23: #{tpu_custom_call.1} parent=1 // pred_check_branch
      %34 = sbr.rel (0) target = $region25
    $region24: #{tpu_custom_call.1} parent=1 // pred_region
      %36 = dma.done [#allocation3], 6272
    $region25: #{tpu_custom_call.1} parent=1 // pred_fallthru
      _
    %v38 = vld [vmem:[%s0] sm:$0xff]
    %v39 = vld [vmem:[%s0 + $0x8] sm:$0xff]
    %v40 = vld [vmem:[%s0 + $0x10] sm:$0xff]
    %v41 = vld [vmem:[%s0 + $0x18] sm:$0xf]
    %v42 = vld [vmem:[#allocation2] sm:$0xf]
    %v43 = vld [vmem:[#allocation2 + $0x4] sm:$0xf]
    %v44 = vld [vmem:[#allocation2 + $0x8] sm:$0xf]
    %v45 = vld [vmem:[#allocation2 + $0xc] sm:$0xf]
    %v46 = vld [vmem:[#allocation2 + $0x10] sm:$0xf]
    %v47 = vld [vmem:[#allocation2 + $0x14] sm:$0xf]
    %v48 = vld [vmem:[#allocation2 + $0x18] sm:$0xf]
    %v49 = vld [vmem:[#allocation2 + $0x1c] sm:$0xf]
    %v50 = vld [vmem:[#allocation2 + $0x20] sm:$0xf]
    %v51 = vld [vmem:[#allocation2 + $0x24] sm:$0xf]
    %v52 = vld [vmem:[#allocation2 + $0x28] sm:$0xf]
    %v53 = vld [vmem:[#allocation2 + $0x2c] sm:$0xf]
    %v54 = vld [vmem:[#allocation2 + $0x30] sm:$0xf]
    %v55 = vld [vmem:[#allocation2 + $0x34] sm:$0xf]
    %v56 = vld [vmem:[#allocation2 + $0x38] sm:$0xf]
    %v57 = vld [vmem:[#allocation2 + $0x3c] sm:$0xf]
    %v58 = vld [vmem:[#allocation2 + $0x40] sm:$0xf]
    %v59 = vld [vmem:[#allocation2 + $0x44] sm:$0xf]
    %v60 = vld [vmem:[#allocation2 + $0x48] sm:$0xf]
    %v61 = vld [vmem:[#allocation2 + $0x4c] sm:$0xf]
    %v62 = vld [vmem:[#allocation2 + $0x50] sm:$0xf]
    %v63 = vld [vmem:[#allocation2 + $0x54] sm:$0xf]
    %v64 = vld [vmem:[#allocation2 + $0x58] sm:$0xf]
    %v65 = vld [vmem:[#allocation2 + $0x5c] sm:$0xf]
    %v66 = vld [vmem:[#allocation2 + $0x60] sm:$0xf]
    %v67 = vld [vmem:[#allocation2 + $0x64] sm:$0xf]
    %v68 = vld [vmem:[#allocation2 + $0x68] sm:$0xf]
    %v69 = vld [vmem:[#allocation2 + $0x6c] sm:$0xf]
    %v70 = vld [vmem:[#allocation2 + $0x70] sm:$0xf]
    %v71 = vld [vmem:[#allocation2 + $0x74] sm:$0xf]
    %v72 = vld [vmem:[#allocation2 + $0x78] sm:$0xf]
    %v73 = vld [vmem:[#allocation2 + $0x7c] sm:$0xf]
    %v74 = vld [vmem:[#allocation2 + $0x80] sm:$0xf]
    %v75 = vld [vmem:[#allocation2 + $0x84] sm:$0xf]
    %v76 = vld [vmem:[#allocation2 + $0x88] sm:$0xf]
    %v77 = vld [vmem:[#allocation2 + $0x8c] sm:$0xf]
    %v78 = vld [vmem:[#allocation2 + $0x90] sm:$0xf]
    %v79 = vld [vmem:[#allocation2 + $0x94] sm:$0xf]
    %v80 = vld [vmem:[#allocation2 + $0x98] sm:$0xf]
    %v81 = vld [vmem:[#allocation2 + $0x9c] sm:$0xf]
    %v82 = vld [vmem:[#allocation2 + $0xa0] sm:$0xf]
    %v83 = vld [vmem:[#allocation2 + $0xa4] sm:$0xf]
    %v84 = vld [vmem:[#allocation2 + $0xa8] sm:$0xf]
    %v85 = vld [vmem:[#allocation2 + $0xac] sm:$0xf]
    %v86 = vld [vmem:[#allocation2 + $0xb0] sm:$0xf]
    %v87 = vld [vmem:[#allocation2 + $0xb4] sm:$0xf]
    %v88 = vld [vmem:[#allocation2 + $0xb8] sm:$0xf]
    %v89 = vld [vmem:[#allocation2 + $0xbc] sm:$0xf]
    %v90 = vld [vmem:[#allocation2 + $0xc0] sm:$0xf]
    %v91 = vld [vmem:[#allocation2 + $0xc4] sm:$0xf]
    %v92 = vld [vmem:[#allocation2 + $0xc8] sm:$0xf]
    %v93 = vld [vmem:[#allocation2 + $0xcc] sm:$0xf]
    %v94 = vld [vmem:[#allocation2 + $0xd0] sm:$0xf]
    %v95 = vld [vmem:[#allocation2 + $0xd4] sm:$0xf]
    %v96 = vld [vmem:[#allocation2 + $0xd8] sm:$0xf]
    %v97 = vld [vmem:[#allocation2 + $0xdc] sm:$0xf]
    %v98 = vld [vmem:[#allocation2 + $0xe0] sm:$0xf]
    %v99 = vld [vmem:[#allocation2 + $0xe4] sm:$0xf]
    %v100 = vld [vmem:[#allocation2 + $0xe8] sm:$0xf]
    %v101 = vld [vmem:[#allocation2 + $0xec] sm:$0xf]
    %v102 = vld [vmem:[#allocation2 + $0xf0] sm:$0xf]
    %v103 = vld [vmem:[#allocation2 + $0xf4] sm:$0xf]
    %v104 = vld [vmem:[#allocation2 + $0xf8] sm:$0xf]
    %v105 = vld [vmem:[#allocation2 + $0xfc] sm:$0xf]
    %v106 = vld [vmem:[#allocation2 + $0x100] sm:$0xf]
    %v107 = vld [vmem:[#allocation2 + $0x104] sm:$0xf]
    %v108 = vld [vmem:[#allocation2 + $0x108] sm:$0xf]
    %v109 = vld [vmem:[#allocation2 + $0x10c] sm:$0xf]
    %v110 = vld [vmem:[#allocation2 + $0x110] sm:$0xf]
    %v111 = vld [vmem:[#allocation2 + $0x114] sm:$0xf]
    %v112 = vld [vmem:[#allocation2 + $0x118] sm:$0xf]
    %v113 = vld [vmem:[#allocation2 + $0x11c] sm:$0xf]
    %v114 = vld [vmem:[#allocation2 + $0x120] sm:$0xf]
    %v115 = vld [vmem:[#allocation2 + $0x124] sm:$0xf]
    %v116 = vld [vmem:[#allocation2 + $0x128] sm:$0xf]
    %v117 = vld [vmem:[#allocation2 + $0x12c] sm:$0xf]
    %v118 = vld [vmem:[#allocation2 + $0x130] sm:$0xf]
    %v119 = vld [vmem:[#allocation2 + $0x134] sm:$0xf]
    %v120 = vld [vmem:[#allocation2 + $0x138] sm:$0xf]
    %v121 = vld [vmem:[#allocation2 + $0x13c] sm:$0xf]
    %v122 = vld [vmem:[#allocation2 + $0x140] sm:$0xf]
    %v123 = vld [vmem:[#allocation2 + $0x144] sm:$0xf]
    %v124 = vld [vmem:[#allocation2 + $0x148] sm:$0xf]
    %v125 = vld [vmem:[#allocation2 + $0x14c] sm:$0xf]
    %v126 = vld [vmem:[#allocation2 + $0x150] sm:$0xf]
    %v127 = vld [vmem:[#allocation2 + $0x154] sm:$0xf]
    %v128 = vld [vmem:[#allocation2 + $0x158] sm:$0xf]
    %v129 = vld [vmem:[#allocation2 + $0x15c] sm:$0xf]
    %v130 = vld [vmem:[#allocation2 + $0x160] sm:$0xf]
    %v131 = vld [vmem:[#allocation2 + $0x164] sm:$0xf]
    %v132 = vld [vmem:[#allocation2 + $0x168] sm:$0xf]
    %v133 = vld [vmem:[#allocation2 + $0x16c] sm:$0xf]
    %v134 = vld [vmem:[#allocation2 + $0x170] sm:$0xf]
    %v135 = vld [vmem:[#allocation2 + $0x174] sm:$0xf]
    %v136 = vld [vmem:[#allocation2 + $0x178] sm:$0xf]
    %v137 = vld [vmem:[#allocation2 + $0x17c] sm:$0xf]
    %v138 = vld [vmem:[#allocation2 + $0x180] sm:$0xf]
    %v139 = vld [vmem:[#allocation2 + $0x184] sm:$0xf]
    %v140 = vld [vmem:[%s2] sm:$0x1]
    %v142 = vperm.slane %v140, 0
    %v148 = vunpack.c.l.b16 %v38
    %v149 = vunpack.c.h.b16 %v38
    %v150 = vunpack.c.l.b16 %v39
    %v151 = vunpack.c.h.b16 %v39
    %v152 = vunpack.c.l.b16 %v40
    %v153 = vunpack.c.h.b16 %v40
    %v154 = vunpack.c.l.b16 %v41
    %v155 = vpack.c.b16 %v148, %v148
    %v156 = vpack.c.b16 %v149, %v149
    %v157 = vpack.c.b16 %v150, %v150
    %v158 = vpack.c.b16 %v151, %v151
    %v159 = vpack.c.b16 %v152, %v152
    %v160 = vpack.c.b16 %v153, %v153
    %v161 = vpack.c.b16 %v154, %v154
    %v266 = vunpack.c.l.b16 %v42
    %v267 = vunpack.c.l.b16 %v43
    %v268 = vunpack.c.l.b16 %v44
    %v269 = vunpack.c.l.b16 %v45
    %v270 = vunpack.c.l.b16 %v46
    %v271 = vunpack.c.l.b16 %v47
    %v272 = vunpack.c.l.b16 %v48
    %v273 = vunpack.c.l.b16 %v49
    %v274 = vunpack.c.l.b16 %v50
    %v275 = vunpack.c.l.b16 %v51
    %v276 = vunpack.c.l.b16 %v52
    %v277 = vunpack.c.l.b16 %v53
    %v278 = vunpack.c.l.b16 %v54
    %v279 = vunpack.c.l.b16 %v55
    %v280 = vunpack.c.l.b16 %v56
    %v281 = vunpack.c.l.b16 %v57
    %v282 = vunpack.c.l.b16 %v58
    %v283 = vunpack.c.l.b16 %v59
    %v284 = vunpack.c.l.b16 %v60
    %v285 = vunpack.c.l.b16 %v61
    %v286 = vunpack.c.l.b16 %v62
    %v287 = vunpack.c.l.b16 %v63
    %v288 = vunpack.c.l.b16 %v64
    %v289 = vunpack.c.l.b16 %v65
    %v290 = vunpack.c.l.b16 %v66
    %v291 = vunpack.c.l.b16 %v67
    %v292 = vunpack.c.l.b16 %v68
    %v293 = vunpack.c.l.b16 %v69
    %v294 = vunpack.c.l.b16 %v70
    %v295 = vunpack.c.l.b16 %v71
    %v296 = vunpack.c.l.b16 %v72
    %v297 = vunpack.c.l.b16 %v73
    %v298 = vunpack.c.l.b16 %v74
    %v299 = vunpack.c.l.b16 %v75
    %v300 = vunpack.c.l.b16 %v76
    %v301 = vunpack.c.l.b16 %v77
    %v302 = vunpack.c.l.b16 %v78
    %v303 = vunpack.c.l.b16 %v79
    %v304 = vunpack.c.l.b16 %v80
    %v305 = vunpack.c.l.b16 %v81
    %v306 = vunpack.c.l.b16 %v82
    %v307 = vunpack.c.l.b16 %v83
    %v308 = vunpack.c.l.b16 %v84
    %v309 = vunpack.c.l.b16 %v85
    %v310 = vunpack.c.l.b16 %v86
    %v311 = vunpack.c.l.b16 %v87
    %v312 = vunpack.c.l.b16 %v88
    %v313 = vunpack.c.l.b16 %v89
    %v314 = vunpack.c.l.b16 %v90
    %v315 = vunpack.c.l.b16 %v91
    %v316 = vunpack.c.l.b16 %v92
    %v317 = vunpack.c.l.b16 %v93
    %v318 = vunpack.c.l.b16 %v94
    %v319 = vunpack.c.l.b16 %v95
    %v320 = vunpack.c.l.b16 %v96
    %v321 = vunpack.c.l.b16 %v97
    %v322 = vunpack.c.l.b16 %v98
    %v323 = vunpack.c.l.b16 %v99
    %v324 = vunpack.c.l.b16 %v100
    %v325 = vunpack.c.l.b16 %v101
    %v326 = vunpack.c.l.b16 %v102
    %v327 = vunpack.c.l.b16 %v103
    %v328 = vunpack.c.l.b16 %v104
    %v329 = vunpack.c.l.b16 %v105
    %v330 = vunpack.c.l.b16 %v106
    %v331 = vunpack.c.l.b16 %v107
    %v332 = vunpack.c.l.b16 %v108
    %v333 = vunpack.c.l.b16 %v109
    %v334 = vunpack.c.l.b16 %v110
    %v335 = vunpack.c.l.b16 %v111
    %v336 = vunpack.c.l.b16 %v112
    %v337 = vunpack.c.l.b16 %v113
    %v338 = vunpack.c.l.b16 %v114
    %v339 = vunpack.c.l.b16 %v115
    %v340 = vunpack.c.l.b16 %v116
    %v341 = vunpack.c.l.b16 %v117
    %v342 = vunpack.c.l.b16 %v118
    %v343 = vunpack.c.l.b16 %v119
    %v344 = vunpack.c.l.b16 %v120
    %v345 = vunpack.c.l.b16 %v121
    %v346 = vunpack.c.l.b16 %v122
    %v347 = vunpack.c.l.b16 %v123
    %v348 = vunpack.c.l.b16 %v124
    %v349 = vunpack.c.l.b16 %v125
    %v350 = vunpack.c.l.b16 %v126
    %v351 = vunpack.c.l.b16 %v127
    %v352 = vunpack.c.l.b16 %v128
    %v353 = vunpack.c.l.b16 %v129
    %v354 = vunpack.c.l.b16 %v130
    %v355 = vunpack.c.l.b16 %v131
    %v356 = vunpack.c.l.b16 %v132
    %v357 = vunpack.c.l.b16 %v133
    %v358 = vunpack.c.l.b16 %v134
    %v359 = vunpack.c.l.b16 %v135
    %v360 = vunpack.c.l.b16 %v136
    %v361 = vunpack.c.l.b16 %v137
    %v362 = vunpack.c.l.b16 %v138
    %v363 = vunpack.c.l.b16 %v139
    %v364 = vpack.c.b16 %v267, %v266
    %v365 = vpack.c.b16 %v269, %v268
    %v366 = vpack.c.b16 %v271, %v270
    %v367 = vpack.c.b16 %v273, %v272
    %v368 = vpack.c.b16 %v275, %v274
    %v369 = vpack.c.b16 %v277, %v276
    %v370 = vpack.c.b16 %v279, %v278
    %v371 = vpack.c.b16 %v281, %v280
    %v372 = vpack.c.b16 %v283, %v282
    %v373 = vpack.c.b16 %v285, %v284
    %v374 = vpack.c.b16 %v287, %v286
    %v375 = vpack.c.b16 %v289, %v288
    %v376 = vpack.c.b16 %v291, %v290
    %v377 = vpack.c.b16 %v293, %v292
    %v378 = vpack.c.b16 %v295, %v294
    %v379 = vpack.c.b16 %v297, %v296
    %v380 = vpack.c.b16 %v299, %v298
    %v381 = vpack.c.b16 %v301, %v300
    %v382 = vpack.c.b16 %v303, %v302
    %v383 = vpack.c.b16 %v305, %v304
    %v384 = vpack.c.b16 %v307, %v306
    %v385 = vpack.c.b16 %v309, %v308
    %v386 = vpack.c.b16 %v311, %v310
    %v387 = vpack.c.b16 %v313, %v312
    %v388 = vpack.c.b16 %v315, %v314
    %v389 = vpack.c.b16 %v317, %v316
    %v390 = vpack.c.b16 %v319, %v318
    %v391 = vpack.c.b16 %v321, %v320
    %v392 = vpack.c.b16 %v323, %v322
    %v393 = vpack.c.b16 %v325, %v324
    %v394 = vpack.c.b16 %v327, %v326
    %v395 = vpack.c.b16 %v329, %v328
    %v396 = vpack.c.b16 %v331, %v330
    %v397 = vpack.c.b16 %v333, %v332
    %v398 = vpack.c.b16 %v335, %v334
    %v399 = vpack.c.b16 %v337, %v336
    %v400 = vpack.c.b16 %v339, %v338
    %v401 = vpack.c.b16 %v341, %v340
    %v402 = vpack.c.b16 %v343, %v342
    %v403 = vpack.c.b16 %v345, %v344
    %v404 = vpack.c.b16 %v347, %v346
    %v405 = vpack.c.b16 %v349, %v348
    %v406 = vpack.c.b16 %v351, %v350
    %v407 = vpack.c.b16 %v353, %v352
    %v408 = vpack.c.b16 %v355, %v354
    %v409 = vpack.c.b16 %v357, %v356
    %v410 = vpack.c.b16 %v359, %v358
    %v411 = vpack.c.b16 %v361, %v360
    %v412 = vpack.c.b16 %v363, %v362
    %vm462 = vcmask 130048
    %v464 = vsel %vm462, %v161, 0
    %466 = vmatpush.bf16.msra.mxu0 %v371
    %467 = vmatpush.bf16.msra.mxu0 %v370
    %468 = vmatpush.bf16.msra.mxu0 %v369
    %469 = vmatpush.bf16.msra.mxu0 %v368
    %470 = vmatpush.bf16.msra.mxu0 %v367
    %471 = vmatpush.bf16.msra.mxu0 %v366
    %472 = vmatpush.bf16.msra.mxu0 %v365
    %473 = vmatpush.bf16.msra.mxu0 %v364
    %474 = vmatmul.bf16.gmra.mxu0 %v155
    %v475 = vpop.f32.mrf.mxu0
    %v476 = vadd.f32 %v142, %v475
    %v477 = vpop.f32.mrf.mxu0
    %478 = vdwg.mxu0
    %479 = vmatpush.bf16.msra.mxu0 %v379
    %480 = vmatpush.bf16.msra.mxu0 %v378
    %481 = vmatpush.bf16.msra.mxu0 %v377
    %482 = vmatpush.bf16.msra.mxu0 %v376
    %483 = vmatpush.bf16.msra.mxu0 %v375
    %484 = vmatpush.bf16.msra.mxu0 %v374
    %485 = vmatpush.bf16.msra.mxu0 %v373
    %486 = vmatpush.bf16.msra.mxu0 %v372
    %487 = vmatmul.bf16.gmra.mxu0 %v156
    %v488 = vpop.f32.mrf.mxu0
    %v489 = vadd.f32 %v476, %v488
    %v490 = vpop.f32.mrf.mxu0
    %491 = vdwg.mxu0
    %492 = vmatpush.bf16.msra.mxu0 %v387
    %493 = vmatpush.bf16.msra.mxu0 %v386
    %494 = vmatpush.bf16.msra.mxu0 %v385
    %495 = vmatpush.bf16.msra.mxu0 %v384
    %496 = vmatpush.bf16.msra.mxu0 %v383
    %497 = vmatpush.bf16.msra.mxu0 %v382
    %498 = vmatpush.bf16.msra.mxu0 %v381
    %499 = vmatpush.bf16.msra.mxu0 %v380
    %500 = vmatmul.bf16.gmra.mxu0 %v157
    %v501 = vpop.f32.mrf.mxu0
    %v502 = vadd.f32 %v489, %v501
    %v503 = vpop.f32.mrf.mxu0
    %504 = vdwg.mxu0
    %505 = vmatpush.bf16.msra.mxu0 %v395
    %506 = vmatpush.bf16.msra.mxu0 %v394
    %507 = vmatpush.bf16.msra.mxu0 %v393
    %508 = vmatpush.bf16.msra.mxu0 %v392
    %509 = vmatpush.bf16.msra.mxu0 %v391
    %510 = vmatpush.bf16.msra.mxu0 %v390
    %511 = vmatpush.bf16.msra.mxu0 %v389
    %512 = vmatpush.bf16.msra.mxu0 %v388
    %513 = vmatmul.bf16.gmra.mxu0 %v158
    %v514 = vpop.f32.mrf.mxu0
    %v515 = vadd.f32 %v502, %v514
    %v516 = vpop.f32.mrf.mxu0
    %517 = vdwg.mxu0
    %518 = vmatpush.bf16.msra.mxu0 %v403
    %519 = vmatpush.bf16.msra.mxu0 %v402
    %520 = vmatpush.bf16.msra.mxu0 %v401
    %521 = vmatpush.bf16.msra.mxu0 %v400
    %522 = vmatpush.bf16.msra.mxu0 %v399
    %523 = vmatpush.bf16.msra.mxu0 %v398
    %524 = vmatpush.bf16.msra.mxu0 %v397
    %525 = vmatpush.bf16.msra.mxu0 %v396
    %526 = vmatmul.bf16.gmra.mxu0 %v159
    %v527 = vpop.f32.mrf.mxu0
    %v528 = vadd.f32 %v515, %v527
    %v529 = vpop.f32.mrf.mxu0
    %530 = vdwg.mxu0
    %531 = vmatpush.bf16.msra.mxu0 %v411
    %532 = vmatpush.bf16.msra.mxu0 %v410
    %533 = vmatpush.bf16.msra.mxu0 %v409
    %534 = vmatpush.bf16.msra.mxu0 %v408
    %535 = vmatpush.bf16.msra.mxu0 %v407
    %536 = vmatpush.bf16.msra.mxu0 %v406
    %537 = vmatpush.bf16.msra.mxu0 %v405
    %538 = vmatpush.bf16.msra.mxu0 %v404
    %539 = vmatmul.bf16.gmra.mxu0 %v160
    %v540 = vpop.f32.mrf.mxu0
    %v541 = vadd.f32 %v528, %v540
    %v542 = vpop.f32.mrf.mxu0
    %543 = vdwg.mxu0
    %544 = vmatpush.bf16.msra.mxu0 0
    %545 = vmatpush.bf16.msra.mxu0 0
    %546 = vmatpush.bf16.msra.mxu0 0
    %547 = vmatpush.bf16.msra.mxu0 0
    %548 = vmatpush.bf16.msra.mxu0 0
    %549 = vmatpush.bf16.msra.mxu0 0
    %550 = vmatpush.bf16.msra.mxu0 0
    %551 = vmatpush.bf16.msra.mxu0 %v412
    %552 = vmatmul.bf16.gmra.mxu0 %v464
    %v553 = vpop.f32.mrf.mxu0
    %v554 = vadd.f32 %v541, %v553
    %v555 = vpop.f32.mrf.mxu0
    %556 = vdwg.mxu0
    %vm557 = vcmp.ge.f32.partialorder %v554, 0.0
    %v558 = vsel %vm557, 1, 0
    %v559 = vcvt.s32.f32 %v558
    %v560 = vpack.c.bf16 %v559, %v559
    %v561 = vld [vmem:[%s3] sm:$0xf]
    %v562 = vld [vmem:[%s3 + $0x4] sm:$0xf]
    %v563 = vld [vmem:[%s3 + $0x8] sm:$0xf]
    %v564 = vld [vmem:[%s3 + $0xc] sm:$0xf]
    %v565 = vld [vmem:[%s3 + $0x10] sm:$0xf]
    %v566 = vld [vmem:[%s3 + $0x14] sm:$0xf]
    %v567 = vld [vmem:[%s3 + $0x18] sm:$0xf]
    %v568 = vld [vmem:[%s3 + $0x1c] sm:$0xf]
    %v569 = vld [vmem:[%s3 + $0x20] sm:$0xf]
    %v570 = vld [vmem:[%s3 + $0x24] sm:$0xf]
    %v571 = vld [vmem:[%s3 + $0x28] sm:$0xf]
    %v572 = vld [vmem:[%s3 + $0x2c] sm:$0xf]
    %v573 = vld [vmem:[%s3 + $0x30] sm:$0xf]
    %v574 = vld [vmem:[%s3 + $0x34] sm:$0xf]
    %v575 = vld [vmem:[%s3 + $0x38] sm:$0xf]
    %v576 = vld [vmem:[%s3 + $0x3c] sm:$0xf]
    %v577 = vld [vmem:[%s4] sm:$0x1]
    %v579 = vperm.slane %v577, 0
    %v597 = vunpack.c.l.b16 %v561
    %v598 = vunpack.c.l.b16 %v562
    %v599 = vunpack.c.l.b16 %v563
    %v600 = vunpack.c.l.b16 %v564
    %v601 = vunpack.c.l.b16 %v565
    %v602 = vunpack.c.l.b16 %v566
    %v603 = vunpack.c.l.b16 %v567
    %v604 = vunpack.c.l.b16 %v568
    %v605 = vunpack.c.l.b16 %v569
    %v606 = vunpack.c.l.b16 %v570
    %v607 = vunpack.c.l.b16 %v571
    %v608 = vunpack.c.l.b16 %v572
    %v609 = vunpack.c.l.b16 %v573
    %v610 = vunpack.c.l.b16 %v574
    %v611 = vunpack.c.l.b16 %v575
    %v612 = vunpack.c.l.b16 %v576
    %v613 = vpack.c.b16 %v598, %v597
    %v614 = vpack.c.b16 %v600, %v599
    %v615 = vpack.c.b16 %v602, %v601
    %v616 = vpack.c.b16 %v604, %v603
    %v617 = vpack.c.b16 %v606, %v605
    %v618 = vpack.c.b16 %v608, %v607
    %v619 = vpack.c.b16 %v610, %v609
    %v620 = vpack.c.b16 %v612, %v611
    %629 = vmatpush.bf16.msra.mxu0 %v620
    %630 = vmatpush.bf16.msra.mxu0 %v619
    %631 = vmatpush.bf16.msra.mxu0 %v618
    %632 = vmatpush.bf16.msra.mxu0 %v617
    %633 = vmatpush.bf16.msra.mxu0 %v616
    %634 = vmatpush.bf16.msra.mxu0 %v615
    %635 = vmatpush.bf16.msra.mxu0 %v614
    %636 = vmatpush.bf16.msra.mxu0 %v613
    %637 = vmatmul.bf16.gmra.mxu0 %v560
    %v638 = vpop.f32.mrf.mxu0
    %v639 = vadd.f32 %v579, %v638
    %v640 = vpop.f32.mrf.mxu0
    %641 = vdwg.mxu0
    %vm642 = vcmask 80896
    %v643 = vsel %vm642, %v639, -inf
    %644 = vmax.xlane.f32.xlu0 %v643
    %v645 = vpop.xlane.xlu0 %644
    %v646 = vsub.f32 %v639, %v645
    %v647 = vmul.f32 %v646, 1.442695
    %v648 = vpow.pop %v647
    %v649 = vsel %vm642, %v648, 0.0
    %650 = vadd.xlane.f32.xlu0 %v649
    %v651 = vpop.xlane.xlu0 %650
    %v652 = vlog2.pop %v651
    %v653 = vmul.f32 %v652, 0.6931472
    %v654 = vsub.f32 %v646, %v653
    %655 = vst.msk [vmem:[#allocation5] sm:$0xff] %vm642, %v654
    // Predicated region
    $region26: #{tpu_custom_call.1} parent=1 // pred_check
      _
    $region27: #{tpu_custom_call.1} parent=1 // pred_check_branch
      %657 = sbr.rel (0) target = $region29
    $region28: #{tpu_custom_call.1} parent=1 // pred_region
      %659 = vsyncadd [#allocation4], 0
      %s661 = sshll.u32 [#allocation5], 4
      %s662 = int_to_ptr.vmem [resolvable:$true] %s661
      %s663 = sshll.u32 %s5, 4
      %s664 = int_to_ptr.hbm [resolvable:$true] %s663
      %666 = dma.vmem_to_hbm [thread:$0]  %s662, 128, %s664, [#allocation4]
    $region29: #{tpu_custom_call.1} parent=1 // pred_fallthru
      _
    // Predicated region
    $region30: #{tpu_custom_call.1} parent=1 // pred_check
      _
    $region31: #{tpu_custom_call.1} parent=1 // pred_check_branch
      %668 = sbr.rel (0) target = $region33
    $region32: #{tpu_custom_call.1} parent=1 // pred_region
      %670 = dma.done [#allocation4], 128
    $region33: #{tpu_custom_call.1} parent=1 // pred_fallthru
      _
    %671 = vsyncpa [#allocation3], 1
    %672 = vsyncpa [#allocation4], 1

</llo_original>
